<compile_context>
chip_gen: v6e
topology: v6e:2x2x1
jax: 0.10.0
libtpu: 0.0.40
codegen_flags: <defaults>
</compile_context>

<pallas_src>
import math

import jax
import jax.numpy as jnp
from jax.experimental import pallas as pl
from jax.experimental.pallas import tpu as pltpu


def odd_floor(a):
    return int(a / 2) * 2 + 1


def _eca_kernel(x_ref, band_ref, bias_ref, o_ref):
    # x_ref: (BB, C, L); band_ref: (C, C); bias_ref: (1, 1); o_ref: (BB, C)
    x = x_ref[...].astype(jnp.float32)
    s = jnp.sum(x, axis=-1)                                     # (BB, C) lane reduce == L * mean
    z = jnp.dot(s, band_ref[...],
                preferred_element_type=jnp.float32) + bias_ref[...]   # banded conv + bias
    o_ref[...] = (1.0 / (1.0 + jnp.exp(-z))).astype(o_ref.dtype)      # sigmoid


def eca_layer(x, conv_w, conv_b, *, batch_block=None):
    """ECA_layer.forward. x: (B, C, L); conv_w: (1, 1, k); conv_b: (1,). Returns (B, C)."""
    B, C, L = x.shape
    k = conv_w.shape[-1]
    pad = (k - 1) // 2

    # --- wrapper glue (plain JAX, exact): express the 'same'-padded Conv1d(1->1, k)
    # along the channel axis as a banded (C, C) matrix, with the pooling 1/L folded in.
    #   out[j] = bias + sum_t w[t] * mean[j + t - pad]  ==  (sum_L(x)/L) @ band + bias
    w = conv_w.reshape(k).astype(jnp.float32)
    i = jnp.arange(C)[:, None]          # input channel index
    j = jnp.arange(C)[None, :]          # output channel index
    tap = i - j + pad                   # which conv tap connects input i to output j
    band = jnp.where((tap >= 0) & (tap < k), w[jnp.clip(tap, 0, k - 1)], 0.0)   # (C, C)
    band = (band / L).astype(jnp.float32)
    bias = conv_b.reshape(1, 1).astype(jnp.float32)

    # Whole batch per grid step by default (amortizes per-step overhead).
    # If tiling a large batch, pick batch_block as a multiple of 8 (sublane constraint).
    bb = B if batch_block is None else min(batch_block, B)
    grid = (pl.cdiv(B, bb),)

    return pl.pallas_call(
        _eca_kernel,
        out_shape=jax.ShapeDtypeStruct((B, C), x.dtype),
        grid=grid,
        in_specs=[
            pl.BlockSpec((bb, C, L), lambda b: (b, 0, 0)),   # x tile (full C, L)
            pl.BlockSpec((C, C), lambda b: (0, 0)),          # banded conv matrix (resident)
            pl.BlockSpec((1, 1), lambda b: (0, 0)),          # conv bias
        ],
        out_specs=pl.BlockSpec((bb, C), lambda b: (b, 0)),
        compiler_params=pltpu.CompilerParams(
            dimension_semantics=("parallel",)),              # batch tiles are independent
    )(x, band, bias)


def reference(x, conv_w, conv_b):
    """Pure-JAX mirror of ECA_layer.forward."""
    B, C, L = x.shape
    k = conv_w.shape[-1]
    pad = (k - 1) // 2
    w = conv_w.reshape(k)
    m = jnp.mean(x, axis=-1)                                  # gap over L -> (B, C)
    mp = jnp.pad(m, ((0, 0), (pad, pad)))                     # 'same' zero padding along C
    out = conv_b.reshape(()) + sum(w[t] * mp[:, t:t + C] for t in range(k))
    return jax.nn.sigmoid(out)                                # (B, C)


if __name__ == "__main__":
    B, C, L = 2, 16, 32
    gamma, b_hp = 2, 1
    k = odd_floor(math.log(C, 2) / gamma + b_hp / gamma)      # kernel_size = 3 for C = 16

    key = jax.random.PRNGKey(0)
    kx, kw, kb = jax.random.split(key, 3)
    x = jax.random.normal(kx, (B, C, L), dtype=jnp.float32)

    # Deterministic synthetic Conv1d(1, 1, k) parameters (PyTorch-style init bound).
    bound = 1.0 / math.sqrt(k)
    conv_w = jax.random.uniform(kw, (1, 1, k), jnp.float32, -bound, bound)
    conv_b = jax.random.uniform(kb, (1,), jnp.float32, -bound, bound)

    out = eca_layer(x, conv_w, conv_b)
    out = jax.block_until_ready(out)

    ref = reference(x, conv_w, conv_b)
    assert out.shape == (B, C)
    if not bool(jnp.allclose(out, ref, atol=1e-5, rtol=1e-5)):
        raise AssertionError("Pallas ECA_layer output mismatch vs JAX reference")
    print("KERNEL_OK")
</pallas_src>

<mosaic_0001>
module attributes {stable_mosaic.version = 11 : i64} {
  func.func @_eca_kernel(%arg0: i32, %arg1: memref<2x16x32xf32, #tpu.memory_space<vmem>>, %arg2: memref<16x16xf32, #tpu.memory_space<vmem>>, %arg3: memref<1x1xf32, #tpu.memory_space<vmem>>, %arg4: memref<2x16xf32, #tpu.memory_space<vmem>>) attributes {dimension_semantics = [#tpu.dimension_semantics<parallel>], iteration_bounds = array<i64: 1>, scalar_prefetch = 0 : i64, scratch_operands = 0 : i64, tpu.core_type = #tpu.core_type<tc>, window_params = [{transform_indices = @transform_0, window_bounds = array<i64: 2, 16, 32>}, {pipeline_mode = #tpu.pipeline_mode<synchronous>, transform_indices = @transform_1, window_bounds = array<i64: 16, 16>}, {pipeline_mode = #tpu.pipeline_mode<synchronous>, transform_indices = @transform_2, window_bounds = array<i64: 1, 1>}, {transform_indices = @transform_3, window_bounds = array<i64: 2, 16>}]} {
    %c0 = arith.constant 0 : index
    %c0_0 = arith.constant 0 : index
    %c0_1 = arith.constant 0 : index
    %0 = vector.load %arg1[%c0, %c0_0, %c0_1] : memref<2x16x32xf32, #tpu.memory_space<vmem>>, vector<2x16x32xf32>
    %cst = arith.constant dense<0.000000e+00> : vector<2x16xf32>
    %1 = vector.multi_reduction <add>, %0, %cst [2] : vector<2x16x32xf32> to vector<2x16xf32>
    %c0_2 = arith.constant 0 : index
    %c0_3 = arith.constant 0 : index
    %2 = vector.load %arg2[%c0_2, %c0_3] : memref<16x16xf32, #tpu.memory_space<vmem>>, vector<16x16xf32>
    %cst_4 = arith.constant dense<0.000000e+00> : vector<2x16xf32>
    %3 = tpu.matmul %1, %2, %cst_4 {dimension_numbers = #tpu.dot_dimension_numbers<[1], [0], [0], [1], [0, 0, 1, 1], [], []>} : vector<2x16xf32>, vector<16x16xf32>, vector<2x16xf32> -> vector<2x16xf32>
    %c0_5 = arith.constant 0 : index
    %c0_6 = arith.constant 0 : index
    %4 = vector.load %arg3[%c0_5, %c0_6] : memref<1x1xf32, #tpu.memory_space<vmem>>, vector<1x1xf32>
    %5 = vector.broadcast %4 : vector<1x1xf32> to vector<2x16xf32>
    %6 = arith.addf %3, %5 : vector<2x16xf32>
    %cst_7 = arith.constant 0.000000e+00 : f32
    %7 = vector.broadcast %cst_7 : f32 to vector<2x16xf32>
    %8 = arith.subf %7, %6 : vector<2x16xf32>
    %9 = math.exp %8 : vector<2x16xf32>
    %cst_8 = arith.constant 1.000000e+00 : f32
    %10 = vector.broadcast %cst_8 : f32 to vector<2x16xf32>
    %11 = arith.addf %10, %9 : vector<2x16xf32>
    %cst_9 = arith.constant 1.000000e+00 : f32
    %12 = vector.broadcast %cst_9 : f32 to vector<2x16xf32>
    %13 = arith.divf %12, %11 : vector<2x16xf32>
    %c0_10 = arith.constant 0 : index
    %c0_11 = arith.constant 0 : index
    %14 = vector.load %arg4[%c0_10, %c0_11] : memref<2x16xf32, #tpu.memory_space<vmem>>, vector<2x16xf32>
    tpu.vector_store %arg4[%c0_10, %c0_11], %13 {strides = array<i32>} : memref<2x16xf32, #tpu.memory_space<vmem>>, vector<2x16xf32>,
    return
  }
  func.func @transform_0(%arg0: i32) -> (i32, i32, i32) {
    %c0_i32 = arith.constant 0 : i32
    %c0_i32_0 = arith.constant 0 : i32
    %c0_i32_1 = arith.constant 0 : i32
    return %arg0, %c0_i32, %c0_i32_0 : i32, i32, i32
  }
  func.func @transform_1(%arg0: i32) -> (i32, i32) {
    %c0_i32 = arith.constant 0 : i32
    %c0_i32_0 = arith.constant 0 : i32
    %c0_i32_1 = arith.constant 0 : i32
    return %c0_i32, %c0_i32_0 : i32, i32
  }
  func.func @transform_2(%arg0: i32) -> (i32, i32) {
    %c0_i32 = arith.constant 0 : i32
    %c0_i32_0 = arith.constant 0 : i32
    %c0_i32_1 = arith.constant 0 : i32
    return %c0_i32, %c0_i32_0 : i32, i32
  }
  func.func @transform_3(%arg0: i32) -> (i32, i32) {
    %c0_i32 = arith.constant 0 : i32
    %c0_i32_0 = arith.constant 0 : i32
    return %arg0, %c0_i32 : i32, i32
  }
}

</mosaic_0001>

<llo_original>
// kernel: tpu_custom_call.1
$region0: #{tpu_custom_call.1}
  #allocation0 [shape = 'u32[]', space=smem, size = 0x4, offset = 0x4, fixed_abs, tag = 'smem constant byte address 0x4 - core index']
  #allocation1 [shape = 'u32[144,128]{1,0:T(1,128)}', space=vmem, size = 0x12000, scoped, tag = 'internal scratch']
  #allocation2 [shape = 'f32[1,1]{1,0:T(1,128)S(1)}', space=vmem, size = 0x200, scoped, tag = 'scoped memory for tpu_custom_call.1']
  %s0 = inlined_call_operand.hbm [shape: f32[2,16,32], index: 0, kind: input, shape index: {}]
  %s1 = inlined_call_operand.hbm [shape: f32[16,16], index: 1, kind: input, shape index: {}]
  %s2 = inlined_call_operand.<no memory space> [shape: f32[1,1], index: 2, kind: input, shape index: {}]
  %s3 = inlined_call_operand.hbm [shape: f32[2,16], index: 3, kind: output, shape index: {}]
  %s4 = sld [smem:[#allocation0]]
  $region30: #{tpu_custom_call.1} parent=0
    _
  %s6 = ssub.s32 1, %s4
  %s7 = scalar_select 0, %s6, %s4
  %v8 = vstv %s2
  %9 = vst [vmem:[#allocation2] sm:$0x1] %v8
  $region1: #{tpu_custom_call.1} parent=0
    #allocation3 [shape = 'u8[16384]{0}', space=vmem, size = 0x4000, scoped, tag = 'input window, operand 0, single buffered']
    #allocation4 [shape = 's32[1]{0}', space=sflag, size = 0x4, scoped, tag = 'scoped memory for tpu_custom_call.1']
    #allocation5 [shape = 's32[1]{0}', space=sflag, size = 0x4, scoped, tag = 'scoped memory for tpu_custom_call.1']
    #allocation6 [shape = 'u8[8192]{0}', space=vmem, size = 0x2000, scoped, tag = 'input window, operand 1, single buffered']
    #allocation7 [shape = 's32[1]{0}', space=sflag, size = 0x4, scoped, tag = 'scoped memory for tpu_custom_call.1']
    #allocation8 [shape = 'u8[1024]{0}', space=vmem, size = 0x400, scoped, tag = 'output window, operand 0, single buffered']
    %10 = vsyncpa [#allocation4], 0
    %11 = vsyncpa [#allocation7], 0
    %12 = vsyncpa [#allocation5], 0
    // Predicated region
    $region2: #{tpu_custom_call.1} parent=1 // pred_check
      _
    $region3: #{tpu_custom_call.1} parent=1 // pred_check_branch
      %14 = sbr.rel (0) target = $region5
    $region4: #{tpu_custom_call.1} parent=1 // pred_region
      %s16 = ssub.s32 512, 512
      %17 = vsyncadd [#allocation4], %s16
      %s18 = sshll.u32 [#allocation3], 4
      %s19 = int_to_ptr.vmem [resolvable:$true] %s18
      %24 = dma.hbm_to_vmem [thread:$0]  %s0, 512, %s19, [#allocation4], 128, 128, 8
    $region5: #{tpu_custom_call.1} parent=1 // pred_fallthru
      _
    // Predicated region
    $region6: #{tpu_custom_call.1} parent=1 // pred_check
      _
    $region7: #{tpu_custom_call.1} parent=1 // pred_check_branch
      %26 = sbr.rel (0) target = $region9
    $region8: #{tpu_custom_call.1} parent=1 // pred_region
      %s28 = ssub.s32 256, 256
      %29 = vsyncadd [#allocation7], %s28
      %s30 = sshll.u32 [#allocation6], 4
      %s31 = int_to_ptr.vmem [resolvable:$true] %s30
      %36 = dma.hbm_to_vmem [thread:$0]  %s1, 256, %s31, [#allocation7], 128, 128, 8
    $region9: #{tpu_custom_call.1} parent=1 // pred_fallthru
      _
    // Predicated region
    $region10: #{tpu_custom_call.1} parent=1 // pred_check
      _
    $region11: #{tpu_custom_call.1} parent=1 // pred_check_branch
      %38 = sbr.rel (0) target = $region13
    $region12: #{tpu_custom_call.1} parent=1 // pred_region
      _
    $region13: #{tpu_custom_call.1} parent=1 // pred_fallthru
      _
    // Predicated region
    $region14: #{tpu_custom_call.1} parent=1 // pred_check
      _
    $region15: #{tpu_custom_call.1} parent=1 // pred_check_branch
      %40 = sbr.rel (0) target = $region17
    $region16: #{tpu_custom_call.1} parent=1 // pred_region
      %41 = dma.done [#allocation4], 512
    $region17: #{tpu_custom_call.1} parent=1 // pred_fallthru
      _
    // Predicated region
    $region18: #{tpu_custom_call.1} parent=1 // pred_check
      _
    $region19: #{tpu_custom_call.1} parent=1 // pred_check_branch
      %43 = sbr.rel (0) target = $region21
    $region20: #{tpu_custom_call.1} parent=1 // pred_region
      %44 = dma.done [#allocation7], 256
    $region21: #{tpu_custom_call.1} parent=1 // pred_fallthru
      _
    %v45 = vld [vmem:[#allocation3] sm:$0xff]
    %v46 = vld [vmem:[#allocation3 + $0x8] sm:$0xff]
    %v47 = vld [vmem:[#allocation3 + $0x10] sm:$0xff]
    %v48 = vld [vmem:[#allocation3 + $0x18] sm:$0xff]
    %vm49 = vcmask 261120
    %v50 = vsel %vm49, %v45, 0.0
    %51 = vadd.xlane.f32.xlu0 %v50
    %v52 = vpop.xlane.xlu0 %51
    %v53 = vsel %vm49, %v46, 0.0
    %54 = vadd.xlane.f32.xlu0 %v53
    %v55 = vpop.xlane.xlu0 %54
    %v56 = vsel %vm49, %v47, 0.0
    %57 = vadd.xlane.f32.xlu0 %v56
    %v58 = vpop.xlane.xlu0 %57
    %v59 = vsel %vm49, %v48, 0.0
    %60 = vadd.xlane.f32.xlu0 %v59
    %v61 = vpop.xlane.xlu0 %60
    %v62 = vld [vmem:[#allocation6] sm:$0xff]
    %v63 = vld [vmem:[#allocation6 + $0x8] sm:$0xff]
    %v64 = vld [vmem:[#allocation2] sm:$0x1]
    %v66 = vlaneseq
    %v67 = vshrl.u32 %v66, 7
    %v68 = vsub.s32 0, %v67
    %v69 = vrot.slane %v64, %v68
    %70 = vset.pattern.permute.xlu0 0
    %71 = vperm.xlu0 %70, %v69
    %v72 = vpop.permute.xlu0 %71
    %v78 = vlaneseq
    %v79 = vand.u32 %v78, 127
    %v80 = vlaneseq
    %v81 = vshrl.u32 %v80, 7
    %v82 = vsub.s32 %v79, %v81
    %v83 = vrot.slane %v52, %v82
    %v84 = vadd.s32 %v79, 4294967288
    %v85 = vlaneseq
    %v86 = vshrl.u32 %v85, 7
    %v87 = vsub.s32 %v84, %v86
    %v88 = vrot.slane %v55, %v87
    %vm89 = vcmask 130112
    %v90 = vsel %vm89, %v88, %v83
    %v91 = vlaneseq
    %v92 = vshrl.u32 %v91, 7
    %v93 = vsub.s32 %v79, %v92
    %v94 = vrot.slane %v58, %v93
    %v95 = vlaneseq
    %v96 = vshrl.u32 %v95, 7
    %v97 = vsub.s32 %v84, %v96
    %v98 = vrot.slane %v61, %v97
    %v99 = vsel %vm89, %v98, %v94
    %vm100 = vcmask 1041409
    %v101 = vsel %vm100, %v99, %v90
    %vm102 = vcmask 130048
    %v103 = vsel %vm102, %v101, 0
    %105 = vmatprep.subr.mxu0 0.0
    %106 = vmatpush1.msra.mxu0 0.0
    %107 = vmatprep.subr.mxu0 0.0
    %108 = vmatpush1.msra.mxu0 0.0
    %109 = vmatprep.subr.mxu0 0.0
    %110 = vmatpush1.msra.mxu0 0.0
    %111 = vmatprep.subr.mxu0 0.0
    %112 = vmatpush1.msra.mxu0 0.0
    %113 = vmatprep.subr.mxu0 0.0
    %114 = vmatpush1.msra.mxu0 0.0
    %115 = vmatprep.subr.mxu0 0.0
    %116 = vmatpush1.msra.mxu0 0.0
    %117 = vmatprep.subr.mxu0 0.0
    %118 = vmatpush1.msra.mxu0 0.0
    %119 = vmatprep.subr.mxu0 0.0
    %120 = vmatpush1.msra.mxu0 0.0
    %121 = vmatprep.subr.mxu0 0.0
    %122 = vmatpush1.msra.mxu0 0.0
    %123 = vmatprep.subr.mxu0 0.0
    %124 = vmatpush1.msra.mxu0 0.0
    %125 = vmatprep.subr.mxu0 0.0
    %126 = vmatpush1.msra.mxu0 0.0
    %127 = vmatprep.subr.mxu0 0.0
    %128 = vmatpush1.msra.mxu0 0.0
    %129 = vmatprep.subr.mxu0 0.0
    %130 = vmatpush1.msra.mxu0 0.0
    %131 = vmatprep.subr.mxu0 0.0
    %132 = vmatpush1.msra.mxu0 0.0
    %133 = vmatprep.subr.mxu0 0.0
    %134 = vmatpush1.msra.mxu0 %v63
    %135 = vmatprep.subr.mxu0 0.0
    %136 = vmatpush1.msra.mxu0 %v62
    %137 = vmatprep.subr.mxu0 0.0
    %138 = vmatpush2.msra.mxu0 0.0
    %139 = vmatprep.subr.mxu0 0.0
    %140 = vmatpush2.msra.mxu0 0.0
    %141 = vmatprep.subr.mxu0 0.0
    %142 = vmatpush2.msra.mxu0 0.0
    %143 = vmatprep.subr.mxu0 0.0
    %144 = vmatpush2.msra.mxu0 0.0
    %145 = vmatprep.subr.mxu0 0.0
    %146 = vmatpush2.msra.mxu0 0.0
    %147 = vmatprep.subr.mxu0 0.0
    %148 = vmatpush2.msra.mxu0 0.0
    %149 = vmatprep.subr.mxu0 0.0
    %150 = vmatpush2.msra.mxu0 0.0
    %151 = vmatprep.subr.mxu0 0.0
    %152 = vmatpush2.msra.mxu0 0.0
    %153 = vmatprep.subr.mxu0 0.0
    %154 = vmatpush2.msra.mxu0 0.0
    %155 = vmatprep.subr.mxu0 0.0
    %156 = vmatpush2.msra.mxu0 0.0
    %157 = vmatprep.subr.mxu0 0.0
    %158 = vmatpush2.msra.mxu0 0.0
    %159 = vmatprep.subr.mxu0 0.0
    %160 = vmatpush2.msra.mxu0 0.0
    %161 = vmatprep.subr.mxu0 0.0
    %162 = vmatpush2.msra.mxu0 0.0
    %163 = vmatprep.subr.mxu0 0.0
    %164 = vmatpush2.msra.mxu0 0.0
    %165 = vmatprep.subr.mxu0 0.0
    %166 = vmatpush2.msra.mxu0 0.0
    %167 = vmatprep.subr.mxu0 0.0
    %168 = vmatpush2.msra.mxu0 0.0
    %169 = vmatprep.mubr.f32.mxu0 0.0
    %170 = vmatmul.mubr.f32.gmra.mxu0 %v103
    %v171 = vpop.f32.mrf.mxu0
    %v172 = vadd.f32 %v72, %v171
    %v173 = vpop.f32.mrf.mxu0
    %174 = vdwg.mxu0
    %v175 = vsub.f32 0.0, %v172
    %v176 = vmul.f32 %v175, 1.442695
    %v177 = vpow.pop %v176
    %v178 = vadd.f32 %v177, 1.0
    %v179 = vrcp.pop %v178
    %v180 = vmul.f32 1.0, %v179
    %vm181 = vcmask 123904
    %182 = vst.msk [vmem:[#allocation8] sm:$0x3] %vm181, %v180
    // Predicated region
    $region22: #{tpu_custom_call.1} parent=1 // pred_check
      _
    $region23: #{tpu_custom_call.1} parent=1 // pred_check_branch
      %184 = sbr.rel (0) target = $region25
    $region24: #{tpu_custom_call.1} parent=1 // pred_region
      %s186 = ssub.s32 32, 32
      %187 = vsyncadd [#allocation5], %s186
      %s189 = sshll.u32 [#allocation8], 4
      %s190 = int_to_ptr.vmem [resolvable:$true] %s189
      %192 = dma.vmem_to_hbm [thread:$0]  %s190, 32, %s3, [#allocation5]
    $region25: #{tpu_custom_call.1} parent=1 // pred_fallthru
      _
    // Predicated region
    $region26: #{tpu_custom_call.1} parent=1 // pred_check
      _
    $region27: #{tpu_custom_call.1} parent=1 // pred_check_branch
      %194 = sbr.rel (0) target = $region29
    $region28: #{tpu_custom_call.1} parent=1 // pred_region
      %195 = dma.done [#allocation5], 32
    $region29: #{tpu_custom_call.1} parent=1 // pred_fallthru
      _
    %196 = vsyncpa [#allocation4], 1
    %197 = vsyncpa [#allocation7], 1
    %198 = vsyncpa [#allocation5], 1

</llo_original>
